<compile_context>
chip_gen: v5e
topology: v5e:2x2
jax: 0.10.0
libtpu: 0.0.40
codegen_flags: <defaults>
</compile_context>

<pallas_src>
import functools

import jax
import jax.numpy as jnp
from jax import lax
from jax.experimental import pallas as pl
from jax.experimental.pallas import tpu as pltpu

INPUT_DIM = 64
H1 = 200
H2 = 100
TARGET_DIM = 1
LN_EPS = 1e-5
CHUNK = 128          # lanes per inner chunk (one vreg-width of batch columns)


def _round_up(n, m):
    return ((n + m - 1) // m) * m


def _supports_bf16_vpu():
    """bf16 VALUs exist on v6e/v7x; v5e (and older) should keep f32 elementwise."""
    try:
        kind = jax.devices()[0].device_kind.lower()
    except Exception:
        return False
    return ("v6" in kind) or ("v7" in kind)


def _ln_relu(h, gamma_b, beta_b, ew_dtype):
    """LayerNorm over features (axis 0) + ReLU.

    h:        (F, C) float32, post-bias activations (batch along lanes).
    gamma_b:  (F, C) ew_dtype, pre-broadcast LN weight.
    beta_b:   (F, C) ew_dtype, pre-broadcast LN bias.

    Two-pass statistics in f32 (matches torch.LayerNorm, avoids E[h^2]-mu^2
    cancellation); normalize / affine / ReLU chain runs in ew_dtype.
    """
    mu = jnp.mean(h, axis=0, keepdims=True)                  # (1, C) f32
    hc = h - mu                                              # f32
    var = jnp.mean(hc * hc, axis=0, keepdims=True)           # (1, C) f32
    inv = lax.rsqrt(var + LN_EPS)                            # EUP, f32
    hn = hc.astype(ew_dtype) * inv.astype(ew_dtype)          # bf16 on v6e/v7x
    hn = hn * gamma_b + beta_b
    return jnp.maximum(hn, jnp.zeros((), hn.dtype))


def discriminator_kernel(x_ref, w1_ref, aux1_ref, w2_ref, aux2_ref,
                         w3_ref, b3_ref, o_ref, *, n_chunks, mm_dtype, ew_dtype):
    # Hoist grid-invariant per-feature vector reads + broadcasts out of the
    # chunk loop (JAX does not CSE broadcast_in_dim).
    b1 = jnp.broadcast_to(aux1_ref[:, 0:1], (H1, CHUNK))                     # f32
    g1 = jnp.broadcast_to(aux1_ref[:, 1:2].astype(ew_dtype), (H1, CHUNK))
    be1 = jnp.broadcast_to(aux1_ref[:, 2:3].astype(ew_dtype), (H1, CHUNK))
    b2 = jnp.broadcast_to(aux2_ref[:, 0:1], (H2, CHUNK))                     # f32
    g2 = jnp.broadcast_to(aux2_ref[:, 1:2].astype(ew_dtype), (H2, CHUNK))
    be2 = jnp.broadcast_to(aux2_ref[:, 2:3].astype(ew_dtype), (H2, CHUNK))
    b3 = b3_ref[...]                                                         # (1, 1)

    # Statically-unrolled loop over 128-lane batch chunks (n_chunks <= 16).
    # Static starts => static ref slices (zero-cost) and aligned lane-dense
    # (1, 128) output stores; intermediates fit the vreg file per chunk.
    for c in range(n_chunks):
        s = c * CHUNK
        xc = x_ref[s:s + CHUNK, :].astype(mm_dtype)                # (C, 64)

        # Layer 1: contract in_features of W1 with last dim of the x chunk
        # ("NT" matmul -- Mosaic handles the orientation, no transpose op).
        h = lax.dot_general(w1_ref[...], xc, (((1,), (1,)), ((), ())),
                            preferred_element_type=jnp.float32)    # (H1, C) f32
        h = _ln_relu(h + b1, g1, be1, ew_dtype)                    # (H1, C)

        # Layer 2: plain matmul, activations already feature-major.
        h = jnp.dot(w2_ref[...], h.astype(mm_dtype),
                    preferred_element_type=jnp.float32)            # (H2, C) f32
        h = _ln_relu(h + b2, g2, be2, ew_dtype)                    # (H2, C)

        # Layer 3 on the (idle) MXU: (1, H2) x (H2, C).
        out = jnp.dot(w3_ref[...], h.astype(mm_dtype),
                      preferred_element_type=jnp.float32) + b3     # (1, C) f32
        o_ref[:, s:s + CHUNK] = out.astype(o_ref.dtype)            # lane-dense store


@functools.partial(jax.jit,
                   static_argnames=("tile_b", "matmul_bf16", "elementwise_bf16"))
def _discriminator_forward(x, params, tile_b, matmul_bf16, elementwise_bf16):
    B, D = x.shape
    assert D == INPUT_DIM
    assert tile_b % CHUNK == 0 and tile_b >= CHUNK
    w1, aux1, w2, aux2, w3, b3 = params

    mm_dtype = jnp.bfloat16 if matmul_bf16 else jnp.float32
    ew_dtype = jnp.bfloat16 if elementwise_bf16 else jnp.float32

    # Batch tile: lane-dense multiple of 128, big enough to amortize per-step
    # pipeline overhead, capped so batches > 128 give >= 2 grid steps
    # (v7x has 2 TensorCores; the grid axis is "parallel").
    tb = min(tile_b, _round_up(B, CHUNK))
    if B > CHUNK and pl.cdiv(B, tb) < 2:
        tb = max(CHUNK, _round_up(pl.cdiv(B, 2), CHUNK))
    n_tiles = pl.cdiv(B, tb)          # last block may be partial (no jnp.pad)
    n_chunks = tb // CHUNK

    kernel = functools.partial(discriminator_kernel, n_chunks=n_chunks,
                               mm_dtype=mm_dtype, ew_dtype=ew_dtype)
    inv = lambda i: (0, 0)            # grid-invariant params: single DMA, reused

    out = pl.pallas_call(
        kernel,
        out_shape=jax.ShapeDtypeStruct((1, B), jnp.float32),
        grid=(n_tiles,),
        in_specs=[
            pl.BlockSpec((tb, INPUT_DIM), lambda i: (i, 0)),   # x tile, natural layout
            pl.BlockSpec((H1, INPUT_DIM), inv),                # W1 (out, in)
            pl.BlockSpec((H1, 3), inv),                        # [b1 | gamma1 | beta1]
            pl.BlockSpec((H2, H1), inv),                       # W2 (out, in)
            pl.BlockSpec((H2, 3), inv),                        # [b2 | gamma2 | beta2]
            pl.BlockSpec((TARGET_DIM, H2), inv),               # W3 (1, 100)
            pl.BlockSpec((1, TARGET_DIM), inv),                # b3 (1, 1)
        ],
        out_specs=pl.BlockSpec((1, tb), lambda i: (0, i)),
        compiler_params=pltpu.CompilerParams(
            dimension_semantics=("parallel",)),
    )(x, w1.astype(mm_dtype), aux1, w2.astype(mm_dtype), aux2,
      w3.astype(mm_dtype), b3)

    return out[0, :][:, None]                                  # (B, 1), float32


def discriminator_forward(x, params, tile_b=2048, matmul_bf16=True,
                          elementwise_bf16=None):
    """x: (batch, 64) -> (batch, 1). bf16 elementwise auto-enabled on v6e/v7x only."""
    if elementwise_bf16 is None:
        elementwise_bf16 = bool(matmul_bf16) and _supports_bf16_vpu()
    return _discriminator_forward(x, params, tile_b=int(tile_b),
                                  matmul_bf16=bool(matmul_bf16),
                                  elementwise_bf16=bool(elementwise_bf16))


def init_params(key):
    """Deterministic synthetic parameters.

    Layout vs PyTorch Discriminator:
      w1, w2, w3   : nn.Linear.weight, native (out_features, in_features)
      aux1, aux2   : columns [Linear.bias, LayerNorm.weight, LayerNorm.bias]
      b3           : nn.Linear(100, 1).bias as (1, 1)
    """
    ks = jax.random.split(key, 6)
    w1 = jax.random.normal(ks[0], (H1, INPUT_DIM), jnp.float32) * 0.05
    b1 = jax.random.normal(ks[1], (H1,), jnp.float32) * 0.05
    aux1 = jnp.stack(
        [b1, jnp.ones((H1,), jnp.float32), jnp.zeros((H1,), jnp.float32)], axis=1)
    w2 = jax.random.normal(ks[2], (H2, H1), jnp.float32) * 0.05
    b2 = jax.random.normal(ks[3], (H2,), jnp.float32) * 0.05
    aux2 = jnp.stack(
        [b2, jnp.ones((H2,), jnp.float32), jnp.zeros((H2,), jnp.float32)], axis=1)
    w3 = jax.random.normal(ks[4], (TARGET_DIM, H2), jnp.float32) * 0.05
    b3 = jax.random.normal(ks[5], (1, TARGET_DIM), jnp.float32) * 0.05
    return (w1, aux1, w2, aux2, w3, b3)


def reference_forward(x, params):
    """Pure-JAX reference with PyTorch semantics (f32, two-pass LayerNorm)."""
    w1, aux1, w2, aux2, w3, b3 = params

    def ln(h, g, be):
        mu = jnp.mean(h, axis=-1, keepdims=True)
        var = jnp.mean((h - mu) ** 2, axis=-1, keepdims=True)
        return (h - mu) / jnp.sqrt(var + LN_EPS) * g + be

    h = x @ w1.T + aux1[:, 0]
    h = jnp.maximum(ln(h, aux1[:, 1], aux1[:, 2]), 0.0)
    h = h @ w2.T + aux2[:, 0]
    h = jnp.maximum(ln(h, aux2[:, 1], aux2[:, 2]), 0.0)
    return h @ w3.T + b3


if __name__ == "__main__":
    key = jax.random.PRNGKey(0)
    kx, kp = jax.random.split(key)
    params = init_params(kp)

    # Small ragged batch: single partial block, full-f32 precision path.
    B = 8
    x = jax.random.normal(kx, (B, INPUT_DIM), jnp.float32)
    out = jax.block_until_ready(
        discriminator_forward(x, params, matmul_bf16=False, elementwise_bf16=False))
    ref = reference_forward(x, params)
    assert out.shape == (B, TARGET_DIM)
    assert jnp.allclose(out, ref, atol=5e-4, rtol=5e-4), "f32 mismatch vs reference"

    # Larger ragged batch: >=2 grid steps, partial last block, inner chunk loop,
    # default fast path (bf16 MXU inputs; bf16 elementwise only on v6e/v7x).
    B2 = 1000
    x2 = jax.random.normal(kx, (B2, INPUT_DIM), jnp.float32)
    out2 = jax.block_until_ready(discriminator_forward(x2, params))
    ref2 = reference_forward(x2, params)
    assert out2.shape == (B2, TARGET_DIM)
    assert jnp.allclose(out2, ref2, atol=2e-1, rtol=1e-1), "bf16 mismatch vs reference"

    print("KERNEL_OK")
</pallas_src>

<mosaic_0001>
module attributes {stable_mosaic.version = 11 : i64} {
  func.func @discriminator_kernel(%arg0: i32, %arg1: memref<128x64xf32, #tpu.memory_space<vmem>>, %arg2: memref<200x64xf32, #tpu.memory_space<vmem>>, %arg3: memref<200x3xf32, #tpu.memory_space<vmem>>, %arg4: memref<100x200xf32, #tpu.memory_space<vmem>>, %arg5: memref<100x3xf32, #tpu.memory_space<vmem>>, %arg6: memref<1x100xf32, #tpu.memory_space<vmem>>, %arg7: memref<1x1xf32, #tpu.memory_space<vmem>>, %arg8: memref<1x128xf32, #tpu.memory_space<vmem>>) attributes {dimension_semantics = [#tpu.dimension_semantics<parallel>], iteration_bounds = array<i64: 1>, scalar_prefetch = 0 : i64, scratch_operands = 0 : i64, tpu.core_type = #tpu.core_type<tc>, window_params = [{transform_indices = @transform_0, window_bounds = array<i64: 128, 64>}, {pipeline_mode = #tpu.pipeline_mode<synchronous>, transform_indices = @transform_1, window_bounds = array<i64: 200, 64>}, {pipeline_mode = #tpu.pipeline_mode<synchronous>, transform_indices = @transform_2, window_bounds = array<i64: 200, 3>}, {pipeline_mode = #tpu.pipeline_mode<synchronous>, transform_indices = @transform_3, window_bounds = array<i64: 100, 200>}, {pipeline_mode = #tpu.pipeline_mode<synchronous>, transform_indices = @transform_4, window_bounds = array<i64: 100, 3>}, {pipeline_mode = #tpu.pipeline_mode<synchronous>, transform_indices = @transform_5, window_bounds = array<i64: 1, 100>}, {pipeline_mode = #tpu.pipeline_mode<synchronous>, transform_indices = @transform_6, window_bounds = array<i64: 1, 1>}, {transform_indices = @transform_7, window_bounds = array<i64: 1, 128>}]} {
    %c0 = arith.constant 0 : index
    %c0_0 = arith.constant 0 : index
    %0 = vector.load %arg3[%c0, %c0_0] : memref<200x3xf32, #tpu.memory_space<vmem>>, vector<200x1xf32>
    %1 = vector.shape_cast %0 : vector<200x1xf32> to vector<200x1xf32>
    %2 = vector.broadcast %1 : vector<200x1xf32> to vector<200x128xf32>
    %c0_1 = arith.constant 0 : index
    %c1 = arith.constant 1 : index
    %3 = vector.load %arg3[%c0_1, %c1] : memref<200x3xf32, #tpu.memory_space<vmem>>, vector<200x1xf32>
    %4 = vector.shape_cast %3 : vector<200x1xf32> to vector<200x1xf32>
    %5 = vector.broadcast %4 : vector<200x1xf32> to vector<200x128xf32>
    %c0_2 = arith.constant 0 : index
    %c2 = arith.constant 2 : index
    %6 = vector.load %arg3[%c0_2, %c2] : memref<200x3xf32, #tpu.memory_space<vmem>>, vector<200x1xf32>
    %7 = vector.shape_cast %6 : vector<200x1xf32> to vector<200x1xf32>
    %8 = vector.broadcast %7 : vector<200x1xf32> to vector<200x128xf32>
    %c0_3 = arith.constant 0 : index
    %c0_4 = arith.constant 0 : index
    %9 = vector.load %arg5[%c0_3, %c0_4] : memref<100x3xf32, #tpu.memory_space<vmem>>, vector<100x1xf32>
    %10 = vector.shape_cast %9 : vector<100x1xf32> to vector<100x1xf32>
    %11 = vector.broadcast %10 : vector<100x1xf32> to vector<100x128xf32>
    %c0_5 = arith.constant 0 : index
    %c1_6 = arith.constant 1 : index
    %12 = vector.load %arg5[%c0_5, %c1_6] : memref<100x3xf32, #tpu.memory_space<vmem>>, vector<100x1xf32>
    %13 = vector.shape_cast %12 : vector<100x1xf32> to vector<100x1xf32>
    %14 = vector.broadcast %13 : vector<100x1xf32> to vector<100x128xf32>
    %c0_7 = arith.constant 0 : index
    %c2_8 = arith.constant 2 : index
    %15 = vector.load %arg5[%c0_7, %c2_8] : memref<100x3xf32, #tpu.memory_space<vmem>>, vector<100x1xf32>
    %16 = vector.shape_cast %15 : vector<100x1xf32> to vector<100x1xf32>
    %17 = vector.broadcast %16 : vector<100x1xf32> to vector<100x128xf32>
    %c0_9 = arith.constant 0 : index
    %c0_10 = arith.constant 0 : index
    %18 = vector.load %arg7[%c0_9, %c0_10] : memref<1x1xf32, #tpu.memory_space<vmem>>, vector<1x1xf32>
    %c0_11 = arith.constant 0 : index
    %c0_12 = arith.constant 0 : index
    %19 = vector.load %arg1[%c0_11, %c0_12] : memref<128x64xf32, #tpu.memory_space<vmem>>, vector<128x64xf32>
    %c0_13 = arith.constant 0 : index
    %c0_14 = arith.constant 0 : index
    %20 = vector.load %arg2[%c0_13, %c0_14] : memref<200x64xf32, #tpu.memory_space<vmem>>, vector<200x64xf32>
    %cst = arith.constant dense<0.000000e+00> : vector<200x128xf32>
    %21 = tpu.matmul %20, %19, %cst {dimension_numbers = #tpu.dot_dimension_numbers<[1], [1], [0], [0], [0, 0, 1, 0], [], []>} : vector<200x64xf32>, vector<128x64xf32>, vector<200x128xf32> -> vector<200x128xf32>
    %22 = arith.addf %21, %2 : vector<200x128xf32>
    %cst_15 = arith.constant dense<0.000000e+00> : vector<128xf32>
    %23 = vector.multi_reduction <add>, %22, %cst_15 [0] : vector<200x128xf32> to vector<128xf32>
    %24 = vector.shape_cast %23 : vector<128xf32> to vector<1x128xf32>
    %cst_16 = arith.constant 2.000000e+02 : f32
    %25 = vector.broadcast %cst_16 : f32 to vector<1x128xf32>
    %26 = arith.divf %24, %25 : vector<1x128xf32>
    %27 = vector.broadcast %26 : vector<1x128xf32> to vector<200x128xf32>
    %28 = arith.subf %22, %27 : vector<200x128xf32>
    %29 = arith.mulf %28, %28 : vector<200x128xf32>
    %cst_17 = arith.constant dense<0.000000e+00> : vector<128xf32>
    %30 = vector.multi_reduction <add>, %29, %cst_17 [0] : vector<200x128xf32> to vector<128xf32>
    %31 = vector.shape_cast %30 : vector<128xf32> to vector<1x128xf32>
    %cst_18 = arith.constant 2.000000e+02 : f32
    %32 = vector.broadcast %cst_18 : f32 to vector<1x128xf32>
    %33 = arith.divf %31, %32 : vector<1x128xf32>
    %cst_19 = arith.constant 9.99999974E-6 : f32
    %34 = vector.broadcast %cst_19 : f32 to vector<1x128xf32>
    %35 = arith.addf %33, %34 : vector<1x128xf32>
    %36 = math.rsqrt %35 : vector<1x128xf32>
    %37 = vector.broadcast %36 : vector<1x128xf32> to vector<200x128xf32>
    %38 = arith.mulf %28, %37 : vector<200x128xf32>
    %39 = arith.mulf %38, %5 : vector<200x128xf32>
    %40 = arith.addf %39, %8 : vector<200x128xf32>
    %cst_20 = arith.constant 0.000000e+00 : f32
    %41 = vector.broadcast %cst_20 : f32 to vector<200x128xf32>
    %42 = arith.maximumf %40, %41 : vector<200x128xf32>
    %c0_21 = arith.constant 0 : index
    %c0_22 = arith.constant 0 : index
    %43 = vector.load %arg4[%c0_21, %c0_22] : memref<100x200xf32, #tpu.memory_space<vmem>>, vector<100x200xf32>
    %cst_23 = arith.constant dense<0.000000e+00> : vector<100x128xf32>
    %44 = tpu.matmul %43, %42, %cst_23 {dimension_numbers = #tpu.dot_dimension_numbers<[1], [0], [0], [1], [0, 0, 1, 1], [], []>} : vector<100x200xf32>, vector<200x128xf32>, vector<100x128xf32> -> vector<100x128xf32>
    %45 = arith.addf %44, %11 : vector<100x128xf32>
    %cst_24 = arith.constant dense<0.000000e+00> : vector<128xf32>
    %46 = vector.multi_reduction <add>, %45, %cst_24 [0] : vector<100x128xf32> to vector<128xf32>
    %47 = vector.shape_cast %46 : vector<128xf32> to vector<1x128xf32>
    %cst_25 = arith.constant 1.000000e+02 : f32
    %48 = vector.broadcast %cst_25 : f32 to vector<1x128xf32>
    %49 = arith.divf %47, %48 : vector<1x128xf32>
    %50 = vector.broadcast %49 : vector<1x128xf32> to vector<100x128xf32>
    %51 = arith.subf %45, %50 : vector<100x128xf32>
    %52 = arith.mulf %51, %51 : vector<100x128xf32>
    %cst_26 = arith.constant dense<0.000000e+00> : vector<128xf32>
    %53 = vector.multi_reduction <add>, %52, %cst_26 [0] : vector<100x128xf32> to vector<128xf32>
    %54 = vector.shape_cast %53 : vector<128xf32> to vector<1x128xf32>
    %cst_27 = arith.constant 1.000000e+02 : f32
    %55 = vector.broadcast %cst_27 : f32 to vector<1x128xf32>
    %56 = arith.divf %54, %55 : vector<1x128xf32>
    %cst_28 = arith.constant 9.99999974E-6 : f32
    %57 = vector.broadcast %cst_28 : f32 to vector<1x128xf32>
    %58 = arith.addf %56, %57 : vector<1x128xf32>
    %59 = math.rsqrt %58 : vector<1x128xf32>
    %60 = vector.broadcast %59 : vector<1x128xf32> to vector<100x128xf32>
    %61 = arith.mulf %51, %60 : vector<100x128xf32>
    %62 = arith.mulf %61, %14 : vector<100x128xf32>
    %63 = arith.addf %62, %17 : vector<100x128xf32>
    %cst_29 = arith.constant 0.000000e+00 : f32
    %64 = vector.broadcast %cst_29 : f32 to vector<100x128xf32>
    %65 = arith.maximumf %63, %64 : vector<100x128xf32>
    %c0_30 = arith.constant 0 : index
    %c0_31 = arith.constant 0 : index
    %66 = vector.load %arg6[%c0_30, %c0_31] : memref<1x100xf32, #tpu.memory_space<vmem>>, vector<1x100xf32>
    %cst_32 = arith.constant dense<0.000000e+00> : vector<1x128xf32>
    %67 = tpu.matmul %66, %65, %cst_32 {dimension_numbers = #tpu.dot_dimension_numbers<[1], [0], [0], [1], [0, 0, 1, 1], [], []>} : vector<1x100xf32>, vector<100x128xf32>, vector<1x128xf32> -> vector<1x128xf32>
    %68 = vector.broadcast %18 : vector<1x1xf32> to vector<1x128xf32>
    %69 = arith.addf %67, %68 : vector<1x128xf32>
    %c0_33 = arith.constant 0 : index
    %c0_34 = arith.constant 0 : index
    %70 = vector.load %arg8[%c0_33, %c0_34] : memref<1x128xf32, #tpu.memory_space<vmem>>, vector<1x128xf32>
    tpu.vector_store %arg8[%c0_33, %c0_34], %69 {strides = array<i32>} : memref<1x128xf32, #tpu.memory_space<vmem>>, vector<1x128xf32>,
    return
  }
  func.func @transform_0(%arg0: i32) -> (i32, i32) {
    %c0_i32 = arith.constant 0 : i32
    %c0_i32_0 = arith.constant 0 : i32
    return %arg0, %c0_i32 : i32, i32
  }
  func.func @transform_1(%arg0: i32) -> (i32, i32) {
    %c0_i32 = arith.constant 0 : i32
    %c0_i32_0 = arith.constant 0 : i32
    %c0_i32_1 = arith.constant 0 : i32
    return %c0_i32, %c0_i32_0 : i32, i32
  }
  func.func @transform_2(%arg0: i32) -> (i32, i32) {
    %c0_i32 = arith.constant 0 : i32
    %c0_i32_0 = arith.constant 0 : i32
    %c0_i32_1 = arith.constant 0 : i32
    return %c0_i32, %c0_i32_0 : i32, i32
  }
  func.func @transform_3(%arg0: i32) -> (i32, i32) {
    %c0_i32 = arith.constant 0 : i32
    %c0_i32_0 = arith.constant 0 : i32
    %c0_i32_1 = arith.constant 0 : i32
    return %c0_i32, %c0_i32_0 : i32, i32
  }
  func.func @transform_4(%arg0: i32) -> (i32, i32) {
    %c0_i32 = arith.constant 0 : i32
    %c0_i32_0 = arith.constant 0 : i32
    %c0_i32_1 = arith.constant 0 : i32
    return %c0_i32, %c0_i32_0 : i32, i32
  }
  func.func @transform_5(%arg0: i32) -> (i32, i32) {
    %c0_i32 = arith.constant 0 : i32
    %c0_i32_0 = arith.constant 0 : i32
    %c0_i32_1 = arith.constant 0 : i32
    return %c0_i32, %c0_i32_0 : i32, i32
  }
  func.func @transform_6(%arg0: i32) -> (i32, i32) {
    %c0_i32 = arith.constant 0 : i32
    %c0_i32_0 = arith.constant 0 : i32
    %c0_i32_1 = arith.constant 0 : i32
    return %c0_i32, %c0_i32_0 : i32, i32
  }
  func.func @transform_7(%arg0: i32) -> (i32, i32) {
    %c0_i32 = arith.constant 0 : i32
    %c0_i32_0 = arith.constant 0 : i32
    return %c0_i32, %arg0 : i32, i32
  }
}

</mosaic_0001>

<llo_original>
// kernel: _discriminator_forward.1
$region0: #{_discriminator_forward.1}
  #allocation0 [shape = 'u32[]', space=smem, size = 0x4, offset = 0x4, fixed_abs, tag = 'smem constant byte address 0x4 - core index']
  #allocation1 [shape = 'u32[72,128]{1,0:T(1,128)}', space=vmem, size = 0x9000, scoped, tag = 'internal scratch']
  #allocation2 [shape = 'f32[1,1]{1,0:T(1,128)S(1)}', space=vmem, size = 0x200, scoped, tag = 'scoped memory for _discriminator_forward.1']
  %s0 = inlined_call_operand.vmem [shape: f32[8,64], index: 0, kind: input, shape index: {}]
  %s1 = inlined_call_operand.vmem [shape: f32[200,64], index: 1, kind: input, shape index: {}]
  %s2 = inlined_call_operand.vmem [shape: f32[200,3], index: 2, kind: input, shape index: {}]
  %s3 = inlined_call_operand.vmem [shape: f32[100,200], index: 3, kind: input, shape index: {}]
  %s4 = inlined_call_operand.vmem [shape: f32[100,3], index: 4, kind: input, shape index: {}]
  %s5 = inlined_call_operand.vmem [shape: f32[1,100], index: 5, kind: input, shape index: {}]
  %s6 = inlined_call_operand.<no memory space> [shape: f32[1,1], index: 6, kind: input, shape index: {}]
  %s7 = inlined_call_operand.hbm [shape: f32[1,8], index: 7, kind: output, shape index: {}]
  %s8 = sld [smem:[#allocation0]]
  $region38: #{_discriminator_forward.1} parent=0
    _
  %s10 = ssub.s32 1, %s8
  %s11 = scalar_select 0, %s10, %s8
  %v12 = vstv %s6
  %13 = vst [vmem:[#allocation2] sm:$0x1] %v12
  $region1: #{_discriminator_forward.1} parent=0
    #allocation3 [shape = 'u8[512]{0}', space=vmem, size = 0x400, scoped, tag = 'output window, operand 0, single buffered']
    #allocation4 [shape = 's32[1]{0}', space=sflag, size = 0x4, scoped, tag = 'scoped memory for _discriminator_forward.1']
    %14 = vsyncpa [#allocation4], 0
    // Predicated region
    $region2: #{_discriminator_forward.1} parent=1 // pred_check
      _
    $region3: #{_discriminator_forward.1} parent=1 // pred_check_branch
      %16 = sbr.rel (0) target = $region5
    $region4: #{_discriminator_forward.1} parent=1 // pred_region
      _
    $region5: #{_discriminator_forward.1} parent=1 // pred_fallthru
      _
    // Predicated region
    $region6: #{_discriminator_forward.1} parent=1 // pred_check
      _
    $region7: #{_discriminator_forward.1} parent=1 // pred_check_branch
      %18 = sbr.rel (0) target = $region9
    $region8: #{_discriminator_forward.1} parent=1 // pred_region
      _
    $region9: #{_discriminator_forward.1} parent=1 // pred_fallthru
      _
    // Predicated region
    $region10: #{_discriminator_forward.1} parent=1 // pred_check
      _
    $region11: #{_discriminator_forward.1} parent=1 // pred_check_branch
      %20 = sbr.rel (0) target = $region13
    $region12: #{_discriminator_forward.1} parent=1 // pred_region
      _
    $region13: #{_discriminator_forward.1} parent=1 // pred_fallthru
      _
    // Predicated region
    $region14: #{_discriminator_forward.1} parent=1 // pred_check
      _
    $region15: #{_discriminator_forward.1} parent=1 // pred_check_branch
      %22 = sbr.rel (0) target = $region17
    $region16: #{_discriminator_forward.1} parent=1 // pred_region
      _
    $region17: #{_discriminator_forward.1} parent=1 // pred_fallthru
      _
    // Predicated region
    $region18: #{_discriminator_forward.1} parent=1 // pred_check
      _
    $region19: #{_discriminator_forward.1} parent=1 // pred_check_branch
      %24 = sbr.rel (0) target = $region21
    $region20: #{_discriminator_forward.1} parent=1 // pred_region
      _
    $region21: #{_discriminator_forward.1} parent=1 // pred_fallthru
      _
    // Predicated region
    $region22: #{_discriminator_forward.1} parent=1 // pred_check
      _
    $region23: #{_discriminator_forward.1} parent=1 // pred_check_branch
      %26 = sbr.rel (0) target = $region25
    $region24: #{_discriminator_forward.1} parent=1 // pred_region
      _
    $region25: #{_discriminator_forward.1} parent=1 // pred_fallthru
      _
    // Predicated region
    $region26: #{_discriminator_forward.1} parent=1 // pred_check
      _
    $region27: #{_discriminator_forward.1} parent=1 // pred_check_branch
      %28 = sbr.rel (0) target = $region29
    $region28: #{_discriminator_forward.1} parent=1 // pred_region
      _
    $region29: #{_discriminator_forward.1} parent=1 // pred_fallthru
      _
    %v29 = vld [vmem:[%s2] sm:$0xff]
    %v30 = vld [vmem:[%s2 + $0x8] sm:$0xff]
    %v31 = vld [vmem:[%s2 + $0x10] sm:$0xff]
    %v32 = vld [vmem:[%s2 + $0x18] sm:$0xff]
    %v33 = vld [vmem:[%s2 + $0x20] sm:$0xff]
    %v34 = vld [vmem:[%s2 + $0x28] sm:$0xff]
    %v35 = vld [vmem:[%s2 + $0x30] sm:$0xff]
    %v36 = vld [vmem:[%s2 + $0x38] sm:$0xff]
    %v37 = vld [vmem:[%s2 + $0x40] sm:$0xff]
    %v38 = vld [vmem:[%s2 + $0x48] sm:$0xff]
    %v39 = vld [vmem:[%s2 + $0x50] sm:$0xff]
    %v40 = vld [vmem:[%s2 + $0x58] sm:$0xff]
    %v41 = vld [vmem:[%s2 + $0x60] sm:$0xff]
    %v42 = vld [vmem:[%s2 + $0x68] sm:$0xff]
    %v43 = vld [vmem:[%s2 + $0x70] sm:$0xff]
    %v44 = vld [vmem:[%s2 + $0x78] sm:$0xff]
    %v45 = vld [vmem:[%s2 + $0x80] sm:$0xff]
    %v46 = vld [vmem:[%s2 + $0x88] sm:$0xff]
    %v47 = vld [vmem:[%s2 + $0x90] sm:$0xff]
    %v48 = vld [vmem:[%s2 + $0x98] sm:$0xff]
    %v49 = vld [vmem:[%s2 + $0xa0] sm:$0xff]
    %v50 = vld [vmem:[%s2 + $0xa8] sm:$0xff]
    %v51 = vld [vmem:[%s2 + $0xb0] sm:$0xff]
    %v52 = vld [vmem:[%s2 + $0xb8] sm:$0xff]
    %v53 = vld [vmem:[%s2 + $0xc0] sm:$0xff]
    %55 = vset.pattern.permute.xlu0 0
    %56 = vperm.xlu0 %55, %v29
    %v57 = vpop.permute.xlu0 %56
    %60 = vset.pattern.permute.xlu0 0
    %61 = vperm.xlu0 %60, %v30
    %v62 = vpop.permute.xlu0 %61
    %65 = vset.pattern.permute.xlu0 0
    %66 = vperm.xlu0 %65, %v31
    %v67 = vpop.permute.xlu0 %66
    %70 = vset.pattern.permute.xlu0 0
    %71 = vperm.xlu0 %70, %v32
    %v72 = vpop.permute.xlu0 %71
    %75 = vset.pattern.permute.xlu0 0
    %76 = vperm.xlu0 %75, %v33
    %v77 = vpop.permute.xlu0 %76
    %80 = vset.pattern.permute.xlu0 0
    %81 = vperm.xlu0 %80, %v34
    %v82 = vpop.permute.xlu0 %81
    %85 = vset.pattern.permute.xlu0 0
    %86 = vperm.xlu0 %85, %v35
    %v87 = vpop.permute.xlu0 %86
    %90 = vset.pattern.permute.xlu0 0
    %91 = vperm.xlu0 %90, %v36
    %v92 = vpop.permute.xlu0 %91
    %95 = vset.pattern.permute.xlu0 0
    %96 = vperm.xlu0 %95, %v37
    %v97 = vpop.permute.xlu0 %96
    %100 = vset.pattern.permute.xlu0 0
    %101 = vperm.xlu0 %100, %v38
    %v102 = vpop.permute.xlu0 %101
    %105 = vset.pattern.permute.xlu0 0
    %106 = vperm.xlu0 %105, %v39
    %v107 = vpop.permute.xlu0 %106
    %110 = vset.pattern.permute.xlu0 0
    %111 = vperm.xlu0 %110, %v40
    %v112 = vpop.permute.xlu0 %111
    %115 = vset.pattern.permute.xlu0 0
    %116 = vperm.xlu0 %115, %v41
    %v117 = vpop.permute.xlu0 %116
    %120 = vset.pattern.permute.xlu0 0
    %121 = vperm.xlu0 %120, %v42
    %v122 = vpop.permute.xlu0 %121
    %125 = vset.pattern.permute.xlu0 0
    %126 = vperm.xlu0 %125, %v43
    %v127 = vpop.permute.xlu0 %126
    %130 = vset.pattern.permute.xlu0 0
    %131 = vperm.xlu0 %130, %v44
    %v132 = vpop.permute.xlu0 %131
    %135 = vset.pattern.permute.xlu0 0
    %136 = vperm.xlu0 %135, %v45
    %v137 = vpop.permute.xlu0 %136
    %140 = vset.pattern.permute.xlu0 0
    %141 = vperm.xlu0 %140, %v46
    %v142 = vpop.permute.xlu0 %141
    %145 = vset.pattern.permute.xlu0 0
    %146 = vperm.xlu0 %145, %v47
    %v147 = vpop.permute.xlu0 %146
    %150 = vset.pattern.permute.xlu0 0
    %151 = vperm.xlu0 %150, %v48
    %v152 = vpop.permute.xlu0 %151
    %155 = vset.pattern.permute.xlu0 0
    %156 = vperm.xlu0 %155, %v49
    %v157 = vpop.permute.xlu0 %156
    %160 = vset.pattern.permute.xlu0 0
    %161 = vperm.xlu0 %160, %v50
    %v162 = vpop.permute.xlu0 %161
    %165 = vset.pattern.permute.xlu0 0
    %166 = vperm.xlu0 %165, %v51
    %v167 = vpop.permute.xlu0 %166
    %170 = vset.pattern.permute.xlu0 0
    %171 = vperm.xlu0 %170, %v52
    %v172 = vpop.permute.xlu0 %171
    %175 = vset.pattern.permute.xlu0 0
    %176 = vperm.xlu0 %175, %v53
    %v177 = vpop.permute.xlu0 %176
    %179 = vset.pattern.permute.xlu0 1
    %180 = vperm.xlu0 %179, %v29
    %v181 = vpop.permute.xlu0 %180
    %183 = vset.pattern.permute.xlu0 1
    %184 = vperm.xlu0 %183, %v30
    %v185 = vpop.permute.xlu0 %184
    %187 = vset.pattern.permute.xlu0 1
    %188 = vperm.xlu0 %187, %v31
    %v189 = vpop.permute.xlu0 %188
    %191 = vset.pattern.permute.xlu0 1
    %192 = vperm.xlu0 %191, %v32
    %v193 = vpop.permute.xlu0 %192
    %195 = vset.pattern.permute.xlu0 1
    %196 = vperm.xlu0 %195, %v33
    %v197 = vpop.permute.xlu0 %196
    %199 = vset.pattern.permute.xlu0 1
    %200 = vperm.xlu0 %199, %v34
    %v201 = vpop.permute.xlu0 %200
    %203 = vset.pattern.permute.xlu0 1
    %204 = vperm.xlu0 %203, %v35
    %v205 = vpop.permute.xlu0 %204
    %207 = vset.pattern.permute.xlu0 1
    %208 = vperm.xlu0 %207, %v36
    %v209 = vpop.permute.xlu0 %208
    %211 = vset.pattern.permute.xlu0 1
    %212 = vperm.xlu0 %211, %v37
    %v213 = vpop.permute.xlu0 %212
    %215 = vset.pattern.permute.xlu0 1
    %216 = vperm.xlu0 %215, %v38
    %v217 = vpop.permute.xlu0 %216
    %219 = vset.pattern.permute.xlu0 1
    %220 = vperm.xlu0 %219, %v39
    %v221 = vpop.permute.xlu0 %220
    %223 = vset.pattern.permute.xlu0 1
    %224 = vperm.xlu0 %223, %v40
    %v225 = vpop.permute.xlu0 %224
    %227 = vset.pattern.permute.xlu0 1
    %228 = vperm.xlu0 %227, %v41
    %v229 = vpop.permute.xlu0 %228
    %231 = vset.pattern.permute.xlu0 1
    %232 = vperm.xlu0 %231, %v42
    %v233 = vpop.permute.xlu0 %232
    %235 = vset.pattern.permute.xlu0 1
    %236 = vperm.xlu0 %235, %v43
    %v237 = vpop.permute.xlu0 %236
    %239 = vset.pattern.permute.xlu0 1
    %240 = vperm.xlu0 %239, %v44
    %v241 = vpop.permute.xlu0 %240
    %243 = vset.pattern.permute.xlu0 1
    %244 = vperm.xlu0 %243, %v45
    %v245 = vpop.permute.xlu0 %244
    %247 = vset.pattern.permute.xlu0 1
    %248 = vperm.xlu0 %247, %v46
    %v249 = vpop.permute.xlu0 %248
    %251 = vset.pattern.permute.xlu0 1
    %252 = vperm.xlu0 %251, %v47
    %v253 = vpop.permute.xlu0 %252
    %255 = vset.pattern.permute.xlu0 1
    %256 = vperm.xlu0 %255, %v48
    %v257 = vpop.permute.xlu0 %256
    %259 = vset.pattern.permute.xlu0 1
    %260 = vperm.xlu0 %259, %v49
    %v261 = vpop.permute.xlu0 %260
    %263 = vset.pattern.permute.xlu0 1
    %264 = vperm.xlu0 %263, %v50
    %v265 = vpop.permute.xlu0 %264
    %267 = vset.pattern.permute.xlu0 1
    %268 = vperm.xlu0 %267, %v51
    %v269 = vpop.permute.xlu0 %268
    %271 = vset.pattern.permute.xlu0 1
    %272 = vperm.xlu0 %271, %v52
    %v273 = vpop.permute.xlu0 %272
    %275 = vset.pattern.permute.xlu0 1
    %276 = vperm.xlu0 %275, %v53
    %v277 = vpop.permute.xlu0 %276
    %279 = vset.pattern.permute.xlu0 2
    %280 = vperm.xlu0 %279, %v29
    %v281 = vpop.permute.xlu0 %280
    %283 = vset.pattern.permute.xlu0 2
    %284 = vperm.xlu0 %283, %v30
    %v285 = vpop.permute.xlu0 %284
    %287 = vset.pattern.permute.xlu0 2
    %288 = vperm.xlu0 %287, %v31
    %v289 = vpop.permute.xlu0 %288
    %291 = vset.pattern.permute.xlu0 2
    %292 = vperm.xlu0 %291, %v32
    %v293 = vpop.permute.xlu0 %292
    %295 = vset.pattern.permute.xlu0 2
    %296 = vperm.xlu0 %295, %v33
    %v297 = vpop.permute.xlu0 %296
    %299 = vset.pattern.permute.xlu0 2
    %300 = vperm.xlu0 %299, %v34
    %v301 = vpop.permute.xlu0 %300
    %303 = vset.pattern.permute.xlu0 2
    %304 = vperm.xlu0 %303, %v35
    %v305 = vpop.permute.xlu0 %304
    %307 = vset.pattern.permute.xlu0 2
    %308 = vperm.xlu0 %307, %v36
    %v309 = vpop.permute.xlu0 %308
    %311 = vset.pattern.permute.xlu0 2
    %312 = vperm.xlu0 %311, %v37
    %v313 = vpop.permute.xlu0 %312
    %315 = vset.pattern.permute.xlu0 2
    %316 = vperm.xlu0 %315, %v38
    %v317 = vpop.permute.xlu0 %316
    %319 = vset.pattern.permute.xlu0 2
    %320 = vperm.xlu0 %319, %v39
    %v321 = vpop.permute.xlu0 %320
    %323 = vset.pattern.permute.xlu0 2
    %324 = vperm.xlu0 %323, %v40
    %v325 = vpop.permute.xlu0 %324
    %327 = vset.pattern.permute.xlu0 2
    %328 = vperm.xlu0 %327, %v41
    %v329 = vpop.permute.xlu0 %328
    %331 = vset.pattern.permute.xlu0 2
    %332 = vperm.xlu0 %331, %v42
    %v333 = vpop.permute.xlu0 %332
    %335 = vset.pattern.permute.xlu0 2
    %336 = vperm.xlu0 %335, %v43
    %v337 = vpop.permute.xlu0 %336
    %339 = vset.pattern.permute.xlu0 2
    %340 = vperm.xlu0 %339, %v44
    %v341 = vpop.permute.xlu0 %340
    %343 = vset.pattern.permute.xlu0 2
    %344 = vperm.xlu0 %343, %v45
    %v345 = vpop.permute.xlu0 %344
    %347 = vset.pattern.permute.xlu0 2
    %348 = vperm.xlu0 %347, %v46
    %v349 = vpop.permute.xlu0 %348
    %351 = vset.pattern.permute.xlu0 2
    %352 = vperm.xlu0 %351, %v47
    %v353 = vpop.permute.xlu0 %352
    %355 = vset.pattern.permute.xlu0 2
    %356 = vperm.xlu0 %355, %v48
    %v357 = vpop.permute.xlu0 %356
    %359 = vset.pattern.permute.xlu0 2
    %360 = vperm.xlu0 %359, %v49
    %v361 = vpop.permute.xlu0 %360
    %363 = vset.pattern.permute.xlu0 2
    %364 = vperm.xlu0 %363, %v50
    %v365 = vpop.permute.xlu0 %364
    %367 = vset.pattern.permute.xlu0 2
    %368 = vperm.xlu0 %367, %v51
    %v369 = vpop.permute.xlu0 %368
    %371 = vset.pattern.permute.xlu0 2
    %372 = vperm.xlu0 %371, %v52
    %v373 = vpop.permute.xlu0 %372
    %375 = vset.pattern.permute.xlu0 2
    %376 = vperm.xlu0 %375, %v53
    %v377 = vpop.permute.xlu0 %376
    %v379 = vld [vmem:[%s4] sm:$0xff]
    %v380 = vld [vmem:[%s4 + $0x8] sm:$0xff]
    %v381 = vld [vmem:[%s4 + $0x10] sm:$0xff]
    %v382 = vld [vmem:[%s4 + $0x18] sm:$0xff]
    %v383 = vld [vmem:[%s4 + $0x20] sm:$0xff]
    %v384 = vld [vmem:[%s4 + $0x28] sm:$0xff]
    %v385 = vld [vmem:[%s4 + $0x30] sm:$0xff]
    %v386 = vld [vmem:[%s4 + $0x38] sm:$0xff]
    %v387 = vld [vmem:[%s4 + $0x40] sm:$0xff]
    %v388 = vld [vmem:[%s4 + $0x48] sm:$0xff]
    %v389 = vld [vmem:[%s4 + $0x50] sm:$0xff]
    %v390 = vld [vmem:[%s4 + $0x58] sm:$0xff]
    %v391 = vld [vmem:[%s4 + $0x60] sm:$0xf]
    %393 = vset.pattern.permute.xlu0 0
    %394 = vperm.xlu0 %393, %v379
    %v395 = vpop.permute.xlu0 %394
    %398 = vset.pattern.permute.xlu0 0
    %399 = vperm.xlu0 %398, %v380
    %v400 = vpop.permute.xlu0 %399
    %403 = vset.pattern.permute.xlu0 0
    %404 = vperm.xlu0 %403, %v381
    %v405 = vpop.permute.xlu0 %404
    %408 = vset.pattern.permute.xlu0 0
    %409 = vperm.xlu0 %408, %v382
    %v410 = vpop.permute.xlu0 %409
    %413 = vset.pattern.permute.xlu0 0
    %414 = vperm.xlu0 %413, %v383
    %v415 = vpop.permute.xlu0 %414
    %418 = vset.pattern.permute.xlu0 0
    %419 = vperm.xlu0 %418, %v384
    %v420 = vpop.permute.xlu0 %419
    %423 = vset.pattern.permute.xlu0 0
    %424 = vperm.xlu0 %423, %v385
    %v425 = vpop.permute.xlu0 %424
    %428 = vset.pattern.permute.xlu0 0
    %429 = vperm.xlu0 %428, %v386
    %v430 = vpop.permute.xlu0 %429
    %433 = vset.pattern.permute.xlu0 0
    %434 = vperm.xlu0 %433, %v387
    %v435 = vpop.permute.xlu0 %434
    %438 = vset.pattern.permute.xlu0 0
    %439 = vperm.xlu0 %438, %v388
    %v440 = vpop.permute.xlu0 %439
    %443 = vset.pattern.permute.xlu0 0
    %444 = vperm.xlu0 %443, %v389
    %v445 = vpop.permute.xlu0 %444
    %448 = vset.pattern.permute.xlu0 0
    %449 = vperm.xlu0 %448, %v390
    %v450 = vpop.permute.xlu0 %449
    %453 = vset.pattern.permute.xlu0 0
    %454 = vperm.xlu0 %453, %v391
    %v455 = vpop.permute.xlu0 %454
    %457 = vset.pattern.permute.xlu0 1
    %458 = vperm.xlu0 %457, %v379
    %v459 = vpop.permute.xlu0 %458
    %461 = vset.pattern.permute.xlu0 1
    %462 = vperm.xlu0 %461, %v380
    %v463 = vpop.permute.xlu0 %462
    %465 = vset.pattern.permute.xlu0 1
    %466 = vperm.xlu0 %465, %v381
    %v467 = vpop.permute.xlu0 %466
    %469 = vset.pattern.permute.xlu0 1
    %470 = vperm.xlu0 %469, %v382
    %v471 = vpop.permute.xlu0 %470
    %473 = vset.pattern.permute.xlu0 1
    %474 = vperm.xlu0 %473, %v383
    %v475 = vpop.permute.xlu0 %474
    %477 = vset.pattern.permute.xlu0 1
    %478 = vperm.xlu0 %477, %v384
    %v479 = vpop.permute.xlu0 %478
    %481 = vset.pattern.permute.xlu0 1
    %482 = vperm.xlu0 %481, %v385
    %v483 = vpop.permute.xlu0 %482
    %485 = vset.pattern.permute.xlu0 1
    %486 = vperm.xlu0 %485, %v386
    %v487 = vpop.permute.xlu0 %486
    %489 = vset.pattern.permute.xlu0 1
    %490 = vperm.xlu0 %489, %v387
    %v491 = vpop.permute.xlu0 %490
    %493 = vset.pattern.permute.xlu0 1
    %494 = vperm.xlu0 %493, %v388
    %v495 = vpop.permute.xlu0 %494
    %497 = vset.pattern.permute.xlu0 1
    %498 = vperm.xlu0 %497, %v389
    %v499 = vpop.permute.xlu0 %498
    %501 = vset.pattern.permute.xlu0 1
    %502 = vperm.xlu0 %501, %v390
    %v503 = vpop.permute.xlu0 %502
    %505 = vset.pattern.permute.xlu0 1
    %506 = vperm.xlu0 %505, %v391
    %v507 = vpop.permute.xlu0 %506
    %509 = vset.pattern.permute.xlu0 2
    %510 = vperm.xlu0 %509, %v379
    %v511 = vpop.permute.xlu0 %510
    %513 = vset.pattern.permute.xlu0 2
    %514 = vperm.xlu0 %513, %v380
    %v515 = vpop.permute.xlu0 %514
    %517 = vset.pattern.permute.xlu0 2
    %518 = vperm.xlu0 %517, %v381
    %v519 = vpop.permute.xlu0 %518
    %521 = vset.pattern.permute.xlu0 2
    %522 = vperm.xlu0 %521, %v382
    %v523 = vpop.permute.xlu0 %522
    %525 = vset.pattern.permute.xlu0 2
    %526 = vperm.xlu0 %525, %v383
    %v527 = vpop.permute.xlu0 %526
    %529 = vset.pattern.permute.xlu0 2
    %530 = vperm.xlu0 %529, %v384
    %v531 = vpop.permute.xlu0 %530
    %533 = vset.pattern.permute.xlu0 2
    %534 = vperm.xlu0 %533, %v385
    %v535 = vpop.permute.xlu0 %534
    %537 = vset.pattern.permute.xlu0 2
    %538 = vperm.xlu0 %537, %v386
    %v539 = vpop.permute.xlu0 %538
    %541 = vset.pattern.permute.xlu0 2
    %542 = vperm.xlu0 %541, %v387
    %v543 = vpop.permute.xlu0 %542
    %545 = vset.pattern.permute.xlu0 2
    %546 = vperm.xlu0 %545, %v388
    %v547 = vpop.permute.xlu0 %546
    %549 = vset.pattern.permute.xlu0 2
    %550 = vperm.xlu0 %549, %v389
    %v551 = vpop.permute.xlu0 %550
    %553 = vset.pattern.permute.xlu0 2
    %554 = vperm.xlu0 %553, %v390
    %v555 = vpop.permute.xlu0 %554
    %557 = vset.pattern.permute.xlu0 2
    %558 = vperm.xlu0 %557, %v391
    %v559 = vpop.permute.xlu0 %558
    %v561 = vld [vmem:[#allocation2] sm:$0x1]
    %v562 = vld [vmem:[%s0] sm:$0xff]
    %v563 = vld [vmem:[%s0 + $0x8] sm:$0xff]
    %v564 = vld [vmem:[%s0 + $0x10] sm:$0xff]
    %v565 = vld [vmem:[%s0 + $0x18] sm:$0xff]
    %v566 = vld [vmem:[%s0 + $0x20] sm:$0xff]
    %v567 = vld [vmem:[%s0 + $0x28] sm:$0xff]
    %v568 = vld [vmem:[%s0 + $0x30] sm:$0xff]
    %v569 = vld [vmem:[%s0 + $0x38] sm:$0xff]
    %v570 = vld [vmem:[%s0 + $0x40] sm:$0xff]
    %v571 = vld [vmem:[%s0 + $0x48] sm:$0xff]
    %v572 = vld [vmem:[%s0 + $0x50] sm:$0xff]
    %v573 = vld [vmem:[%s0 + $0x58] sm:$0xff]
    %v574 = vld [vmem:[%s0 + $0x60] sm:$0xff]
    %v575 = vld [vmem:[%s0 + $0x68] sm:$0xff]
    %v576 = vld [vmem:[%s0 + $0x70] sm:$0xff]
    %v577 = vld [vmem:[%s0 + $0x78] sm:$0xff]
    %v578 = vld [vmem:[%s1] sm:$0xff]
    %v579 = vld [vmem:[%s1 + $0x8] sm:$0xff]
    %v580 = vld [vmem:[%s1 + $0x10] sm:$0xff]
    %v581 = vld [vmem:[%s1 + $0x18] sm:$0xff]
    %v582 = vld [vmem:[%s1 + $0x20] sm:$0xff]
    %v583 = vld [vmem:[%s1 + $0x28] sm:$0xff]
    %v584 = vld [vmem:[%s1 + $0x30] sm:$0xff]
    %v585 = vld [vmem:[%s1 + $0x38] sm:$0xff]
    %v586 = vld [vmem:[%s1 + $0x40] sm:$0xff]
    %v587 = vld [vmem:[%s1 + $0x48] sm:$0xff]
    %v588 = vld [vmem:[%s1 + $0x50] sm:$0xff]
    %v589 = vld [vmem:[%s1 + $0x58] sm:$0xff]
    %v590 = vld [vmem:[%s1 + $0x60] sm:$0xff]
    %v591 = vld [vmem:[%s1 + $0x68] sm:$0xff]
    %v592 = vld [vmem:[%s1 + $0x70] sm:$0xff]
    %v593 = vld [vmem:[%s1 + $0x78] sm:$0xff]
    %v594 = vld [vmem:[%s1 + $0x80] sm:$0xff]
    %v595 = vld [vmem:[%s1 + $0x88] sm:$0xff]
    %v596 = vld [vmem:[%s1 + $0x90] sm:$0xff]
    %v597 = vld [vmem:[%s1 + $0x98] sm:$0xff]
    %v598 = vld [vmem:[%s1 + $0xa0] sm:$0xff]
    %v599 = vld [vmem:[%s1 + $0xa8] sm:$0xff]
    %v600 = vld [vmem:[%s1 + $0xb0] sm:$0xff]
    %v601 = vld [vmem:[%s1 + $0xb8] sm:$0xff]
    %v602 = vld [vmem:[%s1 + $0xc0] sm:$0xff]
    %vm603 = vcmask 523264
    %v605 = vsel %vm603, %v578, 0
    %v608 = vsel %vm603, %v579, 0
    %v611 = vsel %vm603, %v580, 0
    %v614 = vsel %vm603, %v581, 0
    %v617 = vsel %vm603, %v582, 0
    %v620 = vsel %vm603, %v583, 0
    %v623 = vsel %vm603, %v584, 0
    %v626 = vsel %vm603, %v585, 0
    %v629 = vsel %vm603, %v586, 0
    %v632 = vsel %vm603, %v587, 0
    %v635 = vsel %vm603, %v588, 0
    %v638 = vsel %vm603, %v589, 0
    %v641 = vsel %vm603, %v590, 0
    %v644 = vsel %vm603, %v591, 0
    %v647 = vsel %vm603, %v592, 0
    %v650 = vsel %vm603, %v593, 0
    %v653 = vsel %vm603, %v594, 0
    %v656 = vsel %vm603, %v595, 0
    %v659 = vsel %vm603, %v596, 0
    %v662 = vsel %vm603, %v597, 0
    %v665 = vsel %vm603, %v598, 0
    %v668 = vsel %vm603, %v599, 0
    %v671 = vsel %vm603, %v600, 0
    %v674 = vsel %vm603, %v601, 0
    %v677 = vsel %vm603, %v602, 0
    %v680 = vsel %vm603, %v562, 0
    %v683 = vsel %vm603, %v563, 0
    %v686 = vsel %vm603, %v564, 0
    %v689 = vsel %vm603, %v565, 0
    %v692 = vsel %vm603, %v566, 0
    %v695 = vsel %vm603, %v567, 0
    %v698 = vsel %vm603, %v568, 0
    %v701 = vsel %vm603, %v569, 0
    %v704 = vsel %vm603, %v570, 0
    %v707 = vsel %vm603, %v571, 0
    %v710 = vsel %vm603, %v572, 0
    %v713 = vsel %vm603, %v573, 0
    %v716 = vsel %vm603, %v574, 0
    %v719 = vsel %vm603, %v575, 0
    %v722 = vsel %vm603, %v576, 0
    %v725 = vsel %vm603, %v577, 0
    %727 = vmatpush.xpose.msra.mxu0 %v725
    %728 = vmatpush.xpose.msra.mxu0 %v722
    %729 = vmatpush.xpose.msra.mxu0 %v719
    %730 = vmatpush.xpose.msra.mxu0 %v716
    %731 = vmatpush.xpose.msra.mxu0 %v713
    %732 = vmatpush.xpose.msra.mxu0 %v710
    %733 = vmatpush.xpose.msra.mxu0 %v707
    %734 = vmatpush.xpose.msra.mxu0 %v704
    %735 = vmatpush.xpose.msra.mxu0 %v701
    %736 = vmatpush.xpose.msra.mxu0 %v698
    %737 = vmatpush.xpose.msra.mxu0 %v695
    %738 = vmatpush.xpose.msra.mxu0 %v692
    %739 = vmatpush.xpose.msra.mxu0 %v689
    %740 = vmatpush.xpose.msra.mxu0 %v686
    %741 = vmatpush.xpose.msra.mxu0 %v683
    %742 = vmatpush.xpose.msra.mxu0 %v680
    %743 = vmatmul.f32.gmra.mxu0 %v605
    %v744 = vpop.f32.mrf.mxu0
    %v745 = vadd.f32 %v57, %v744
    %746 = vmatmul.f32.gmra.mxu0 %v608
    %v747 = vpop.f32.mrf.mxu0
    %v748 = vadd.f32 %v62, %v747
    %749 = vmatmul.f32.gmra.mxu0 %v611
    %v750 = vpop.f32.mrf.mxu0
    %v751 = vadd.f32 %v67, %v750
    %752 = vmatmul.f32.gmra.mxu0 %v614
    %v753 = vpop.f32.mrf.mxu0
    %v754 = vadd.f32 %v72, %v753
    %755 = vmatmul.f32.gmra.mxu0 %v617
    %v756 = vpop.f32.mrf.mxu0
    %v757 = vadd.f32 %v77, %v756
    %758 = vmatmul.f32.gmra.mxu0 %v620
    %v759 = vpop.f32.mrf.mxu0
    %v760 = vadd.f32 %v82, %v759
    %761 = vmatmul.f32.gmra.mxu0 %v623
    %v762 = vpop.f32.mrf.mxu0
    %v763 = vadd.f32 %v87, %v762
    %764 = vmatmul.f32.gmra.mxu0 %v626
    %v765 = vpop.f32.mrf.mxu0
    %v766 = vadd.f32 %v92, %v765
    %767 = vmatmul.f32.gmra.mxu0 %v629
    %v768 = vpop.f32.mrf.mxu0
    %v769 = vadd.f32 %v97, %v768
    %770 = vmatmul.f32.gmra.mxu0 %v632
    %v771 = vpop.f32.mrf.mxu0
    %v772 = vadd.f32 %v102, %v771
    %773 = vmatmul.f32.gmra.mxu0 %v635
    %v774 = vpop.f32.mrf.mxu0
    %v775 = vadd.f32 %v107, %v774
    %776 = vmatmul.f32.gmra.mxu0 %v638
    %v777 = vpop.f32.mrf.mxu0
    %v778 = vadd.f32 %v112, %v777
    %779 = vmatmul.f32.gmra.mxu0 %v641
    %v780 = vpop.f32.mrf.mxu0
    %v781 = vadd.f32 %v117, %v780
    %782 = vmatmul.f32.gmra.mxu0 %v644
    %v783 = vpop.f32.mrf.mxu0
    %v784 = vadd.f32 %v122, %v783
    %785 = vmatmul.f32.gmra.mxu0 %v647
    %v786 = vpop.f32.mrf.mxu0
    %v787 = vadd.f32 %v127, %v786
    %788 = vmatmul.f32.gmra.mxu0 %v650
    %v789 = vpop.f32.mrf.mxu0
    %v790 = vadd.f32 %v132, %v789
    %791 = vmatmul.f32.gmra.mxu0 %v653
    %v792 = vpop.f32.mrf.mxu0
    %v793 = vadd.f32 %v137, %v792
    %794 = vmatmul.f32.gmra.mxu0 %v656
    %v795 = vpop.f32.mrf.mxu0
    %v796 = vadd.f32 %v142, %v795
    %797 = vmatmul.f32.gmra.mxu0 %v659
    %v798 = vpop.f32.mrf.mxu0
    %v799 = vadd.f32 %v147, %v798
    %800 = vmatmul.f32.gmra.mxu0 %v662
    %v801 = vpop.f32.mrf.mxu0
    %v802 = vadd.f32 %v152, %v801
    %803 = vmatmul.f32.gmra.mxu0 %v665
    %v804 = vpop.f32.mrf.mxu0
    %v805 = vadd.f32 %v157, %v804
    %806 = vmatmul.f32.gmra.mxu0 %v668
    %v807 = vpop.f32.mrf.mxu0
    %v808 = vadd.f32 %v162, %v807
    %809 = vmatmul.f32.gmra.mxu0 %v671
    %v810 = vpop.f32.mrf.mxu0
    %v811 = vadd.f32 %v167, %v810
    %812 = vmatmul.f32.gmra.mxu0 %v674
    %v813 = vpop.f32.mrf.mxu0
    %v814 = vadd.f32 %v172, %v813
    %815 = vmatmul.f32.gmra.mxu0 %v677
    %v816 = vpop.f32.mrf.mxu0
    %v817 = vadd.f32 %v177, %v816
    %818 = vdwg.mxu0
    %v819 = vadd.f32 %v745, %v748
    %v820 = vadd.f32 %v819, %v751
    %v821 = vadd.f32 %v820, %v754
    %v822 = vadd.f32 %v821, %v757
    %v823 = vadd.f32 %v822, %v760
    %v824 = vadd.f32 %v823, %v763
    %v825 = vadd.f32 %v824, %v766
    %v826 = vadd.f32 %v825, %v769
    %v827 = vadd.f32 %v826, %v772
    %v828 = vadd.f32 %v827, %v775
    %v829 = vadd.f32 %v828, %v778
    %v830 = vadd.f32 %v829, %v781
    %v831 = vadd.f32 %v830, %v784
    %v832 = vadd.f32 %v831, %v787
    %v833 = vadd.f32 %v832, %v790
    %v834 = vadd.f32 %v833, %v793
    %v835 = vadd.f32 %v834, %v796
    %v836 = vadd.f32 %v835, %v799
    %v837 = vadd.f32 %v836, %v802
    %v838 = vadd.f32 %v837, %v805
    %v839 = vadd.f32 %v838, %v808
    %v840 = vadd.f32 %v839, %v811
    %v841 = vadd.f32 %v840, %v814
    %v842 = vadd.f32 %v841, %v817
    %v843 = vrot.slane %v842, 4
    %v844 = vadd.f32 %v842, %v843
    %v845 = vrot.slane %v844, 2
    %v846 = vadd.f32 %v844, %v845
    %v847 = vrot.slane %v846, 1
    %v848 = vadd.f32 %v846, %v847
    %v849 = vrcp.pop 200.0
    %v850 = vmul.f32 200.0, %v849
    %v851 = vsub.f32 1.0, %v850
    %v852 = vmul.f32 %v849, %v851
    %v853 = vadd.f32 %v849, %v852
    %vm854 = vweird.f32 %v849
    %v855 = vsel %vm854, %v849, %v853
    %v856 = vmul.f32 %v848, %v855
    %v857 = vsub.f32 %v745, %v856
    %v858 = vsub.f32 %v748, %v856
    %v859 = vsub.f32 %v751, %v856
    %v860 = vsub.f32 %v754, %v856
    %v861 = vsub.f32 %v757, %v856
    %v862 = vsub.f32 %v760, %v856
    %v863 = vsub.f32 %v763, %v856
    %v864 = vsub.f32 %v766, %v856
    %v865 = vsub.f32 %v769, %v856
    %v866 = vsub.f32 %v772, %v856
    %v867 = vsub.f32 %v775, %v856
    %v868 = vsub.f32 %v778, %v856
    %v869 = vsub.f32 %v781, %v856
    %v870 = vsub.f32 %v784, %v856
    %v871 = vsub.f32 %v787, %v856
    %v872 = vsub.f32 %v790, %v856
    %v873 = vsub.f32 %v793, %v856
    %v874 = vsub.f32 %v796, %v856
    %v875 = vsub.f32 %v799, %v856
    %v876 = vsub.f32 %v802, %v856
    %v877 = vsub.f32 %v805, %v856
    %v878 = vsub.f32 %v808, %v856
    %v879 = vsub.f32 %v811, %v856
    %v880 = vsub.f32 %v814, %v856
    %v881 = vsub.f32 %v817, %v856
    %v882 = vmul.f32 %v857, %v857
    %v883 = vmul.f32 %v858, %v858
    %v884 = vmul.f32 %v859, %v859
    %v885 = vmul.f32 %v860, %v860
    %v886 = vmul.f32 %v861, %v861
    %v887 = vmul.f32 %v862, %v862
    %v888 = vmul.f32 %v863, %v863
    %v889 = vmul.f32 %v864, %v864
    %v890 = vmul.f32 %v865, %v865
    %v891 = vmul.f32 %v866, %v866
    %v892 = vmul.f32 %v867, %v867
    %v893 = vmul.f32 %v868, %v868
    %v894 = vmul.f32 %v869, %v869
    %v895 = vmul.f32 %v870, %v870
    %v896 = vmul.f32 %v871, %v871
    %v897 = vmul.f32 %v872, %v872
    %v898 = vmul.f32 %v873, %v873
    %v899 = vmul.f32 %v874, %v874
    %v900 = vmul.f32 %v875, %v875
    %v901 = vmul.f32 %v876, %v876
    %v902 = vmul.f32 %v877, %v877
    %v903 = vmul.f32 %v878, %v878
    %v904 = vmul.f32 %v879, %v879
    %v905 = vmul.f32 %v880, %v880
    %v906 = vmul.f32 %v881, %v881
    %v907 = vadd.f32 %v882, %v883
    %v908 = vadd.f32 %v907, %v884
    %v909 = vadd.f32 %v908, %v885
    %v910 = vadd.f32 %v909, %v886
    %v911 = vadd.f32 %v910, %v887
    %v912 = vadd.f32 %v911, %v888
    %v913 = vadd.f32 %v912, %v889
    %v914 = vadd.f32 %v913, %v890
    %v915 = vadd.f32 %v914, %v891
    %v916 = vadd.f32 %v915, %v892
    %v917 = vadd.f32 %v916, %v893
    %v918 = vadd.f32 %v917, %v894
    %v919 = vadd.f32 %v918, %v895
    %v920 = vadd.f32 %v919, %v896
    %v921 = vadd.f32 %v920, %v897
    %v922 = vadd.f32 %v921, %v898
    %v923 = vadd.f32 %v922, %v899
    %v924 = vadd.f32 %v923, %v900
    %v925 = vadd.f32 %v924, %v901
    %v926 = vadd.f32 %v925, %v902
    %v927 = vadd.f32 %v926, %v903
    %v928 = vadd.f32 %v927, %v904
    %v929 = vadd.f32 %v928, %v905
    %v930 = vadd.f32 %v929, %v906
    %v931 = vrot.slane %v930, 4
    %v932 = vadd.f32 %v930, %v931
    %v933 = vrot.slane %v932, 2
    %v934 = vadd.f32 %v932, %v933
    %v935 = vrot.slane %v934, 1
    %v936 = vadd.f32 %v934, %v935
    %v937 = vmul.f32 %v936, %v855
    %v938 = vadd.f32 %v937, 1e-05
    %v939 = vrsqrt.pop %v938
    %v940 = vmul.f32 %v939, %v938
    %v941 = vmul.f32 %v940, %v939
    %v942 = vmul.f32 0.5, %v941
    %v943 = vsub.f32 1.5, %v942
    %v944 = vmul.f32 %v939, %v943
    %vm945 = vweird.f32 %v938
    %vm946 = vweird.f32 %v939
    %vm947 = vmor %vm945, %vm946
    %v948 = vsel %vm947, %v939, %v944
    %v949 = vmul.f32 %v857, %v948
    %v950 = vmul.f32 %v858, %v948
    %v951 = vmul.f32 %v859, %v948
    %v952 = vmul.f32 %v860, %v948
    %v953 = vmul.f32 %v861, %v948
    %v954 = vmul.f32 %v862, %v948
    %v955 = vmul.f32 %v863, %v948
    %v956 = vmul.f32 %v864, %v948
    %v957 = vmul.f32 %v865, %v948
    %v958 = vmul.f32 %v866, %v948
    %v959 = vmul.f32 %v867, %v948
    %v960 = vmul.f32 %v868, %v948
    %v961 = vmul.f32 %v869, %v948
    %v962 = vmul.f32 %v870, %v948
    %v963 = vmul.f32 %v871, %v948
    %v964 = vmul.f32 %v872, %v948
    %v965 = vmul.f32 %v873, %v948
    %v966 = vmul.f32 %v874, %v948
    %v967 = vmul.f32 %v875, %v948
    %v968 = vmul.f32 %v876, %v948
    %v969 = vmul.f32 %v877, %v948
    %v970 = vmul.f32 %v878, %v948
    %v971 = vmul.f32 %v879, %v948
    %v972 = vmul.f32 %v880, %v948
    %v973 = vmul.f32 %v881, %v948
    %v974 = vmul.f32 %v949, %v181
    %v975 = vmul.f32 %v950, %v185
    %v976 = vmul.f32 %v951, %v189
    %v977 = vmul.f32 %v952, %v193
    %v978 = vmul.f32 %v953, %v197
    %v979 = vmul.f32 %v954, %v201
    %v980 = vmul.f32 %v955, %v205
    %v981 = vmul.f32 %v956, %v209
    %v982 = vmul.f32 %v957, %v213
    %v983 = vmul.f32 %v958, %v217
    %v984 = vmul.f32 %v959, %v221
    %v985 = vmul.f32 %v960, %v225
    %v986 = vmul.f32 %v961, %v229
    %v987 = vmul.f32 %v962, %v233
    %v988 = vmul.f32 %v963, %v237
    %v989 = vmul.f32 %v964, %v241
    %v990 = vmul.f32 %v965, %v245
    %v991 = vmul.f32 %v966, %v249
    %v992 = vmul.f32 %v967, %v253
    %v993 = vmul.f32 %v968, %v257
    %v994 = vmul.f32 %v969, %v261
    %v995 = vmul.f32 %v970, %v265
    %v996 = vmul.f32 %v971, %v269
    %v997 = vmul.f32 %v972, %v273
    %v998 = vmul.f32 %v973, %v277
    %v999 = vadd.f32 %v974, %v281
    %v1000 = vadd.f32 %v975, %v285
    %v1001 = vadd.f32 %v976, %v289
    %v1002 = vadd.f32 %v977, %v293
    %v1003 = vadd.f32 %v978, %v297
    %v1004 = vadd.f32 %v979, %v301
    %v1005 = vadd.f32 %v980, %v305
    %v1006 = vadd.f32 %v981, %v309
    %v1007 = vadd.f32 %v982, %v313
    %v1008 = vadd.f32 %v983, %v317
    %v1009 = vadd.f32 %v984, %v321
    %v1010 = vadd.f32 %v985, %v325
    %v1011 = vadd.f32 %v986, %v329
    %v1012 = vadd.f32 %v987, %v333
    %v1013 = vadd.f32 %v988, %v337
    %v1014 = vadd.f32 %v989, %v341
    %v1015 = vadd.f32 %v990, %v345
    %v1016 = vadd.f32 %v991, %v349
    %v1017 = vadd.f32 %v992, %v353
    %v1018 = vadd.f32 %v993, %v357
    %v1019 = vadd.f32 %v994, %v361
    %v1020 = vadd.f32 %v995, %v365
    %v1021 = vadd.f32 %v996, %v369
    %v1022 = vadd.f32 %v997, %v373
    %v1023 = vadd.f32 %v998, %v377
    %v1024 = vmax.f32 %v999, 0.0
    %v1025 = vmax.f32 %v1000, 0.0
    %v1026 = vmax.f32 %v1001, 0.0
    %v1027 = vmax.f32 %v1002, 0.0
    %v1028 = vmax.f32 %v1003, 0.0
    %v1029 = vmax.f32 %v1004, 0.0
    %v1030 = vmax.f32 %v1005, 0.0
    %v1031 = vmax.f32 %v1006, 0.0
    %v1032 = vmax.f32 %v1007, 0.0
    %v1033 = vmax.f32 %v1008, 0.0
    %v1034 = vmax.f32 %v1009, 0.0
    %v1035 = vmax.f32 %v1010, 0.0
    %v1036 = vmax.f32 %v1011, 0.0
    %v1037 = vmax.f32 %v1012, 0.0
    %v1038 = vmax.f32 %v1013, 0.0
    %v1039 = vmax.f32 %v1014, 0.0
    %v1040 = vmax.f32 %v1015, 0.0
    %v1041 = vmax.f32 %v1016, 0.0
    %v1042 = vmax.f32 %v1017, 0.0
    %v1043 = vmax.f32 %v1018, 0.0
    %v1044 = vmax.f32 %v1019, 0.0
    %v1045 = vmax.f32 %v1020, 0.0
    %v1046 = vmax.f32 %v1021, 0.0
    %v1047 = vmax.f32 %v1022, 0.0
    %v1048 = vmax.f32 %v1023, 0.0
    %v1049 = vld [vmem:[%s3] sm:$0xff]
    %v1050 = vld [vmem:[%s3 + $0x8] sm:$0xff]
    %v1051 = vld [vmem:[%s3 + $0x10] sm:$0xff]
    %v1052 = vld [vmem:[%s3 + $0x18] sm:$0xff]
    %v1053 = vld [vmem:[%s3 + $0x20] sm:$0xff]
    %v1054 = vld [vmem:[%s3 + $0x28] sm:$0xff]
    %v1055 = vld [vmem:[%s3 + $0x30] sm:$0xff]
    %v1056 = vld [vmem:[%s3 + $0x38] sm:$0xff]
    %v1057 = vld [vmem:[%s3 + $0x40] sm:$0xff]
    %v1058 = vld [vmem:[%s3 + $0x48] sm:$0xff]
    %v1059 = vld [vmem:[%s3 + $0x50] sm:$0xff]
    %v1060 = vld [vmem:[%s3 + $0x58] sm:$0xff]
    %v1061 = vld [vmem:[%s3 + $0x60] sm:$0xff]
    %v1062 = vld [vmem:[%s3 + $0x68] sm:$0xff]
    %v1063 = vld [vmem:[%s3 + $0x70] sm:$0xff]
    %v1064 = vld [vmem:[%s3 + $0x78] sm:$0xff]
    %v1065 = vld [vmem:[%s3 + $0x80] sm:$0xff]
    %v1066 = vld [vmem:[%s3 + $0x88] sm:$0xff]
    %v1067 = vld [vmem:[%s3 + $0x90] sm:$0xff]
    %v1068 = vld [vmem:[%s3 + $0x98] sm:$0xff]
    %v1069 = vld [vmem:[%s3 + $0xa0] sm:$0xff]
    %v1070 = vld [vmem:[%s3 + $0xa8] sm:$0xff]
    %v1071 = vld [vmem:[%s3 + $0xb0] sm:$0xff]
    %v1072 = vld [vmem:[%s3 + $0xb8] sm:$0xff]
    %v1073 = vld [vmem:[%s3 + $0xc0] sm:$0xf]
    %v1074 = vld [vmem:[%s3 + $0xc8] sm:$0xf]
    %vm1075 = vcmask 588800
    %v1077 = vsel %vm1075, %v1050, 0
    %v1080 = vsel %vm1075, %v1052, 0
    %v1083 = vsel %vm1075, %v1054, 0
    %v1086 = vsel %vm1075, %v1056, 0
    %v1089 = vsel %vm1075, %v1058, 0
    %v1092 = vsel %vm1075, %v1060, 0
    %v1095 = vsel %vm1075, %v1062, 0
    %v1098 = vsel %vm1075, %v1064, 0
    %v1101 = vsel %vm1075, %v1066, 0
    %v1104 = vsel %vm1075, %v1068, 0
    %v1107 = vsel %vm1075, %v1070, 0
    %v1110 = vsel %vm1075, %v1072, 0
    %v1113 = vsel %vm1075, %v1074, 0
    %1115 = vmatpush.msra.mxu0 %v1039
    %1116 = vmatpush.msra.mxu0 %v1038
    %1117 = vmatpush.msra.mxu0 %v1037
    %1118 = vmatpush.msra.mxu0 %v1036
    %1119 = vmatpush.msra.mxu0 %v1035
    %1120 = vmatpush.msra.mxu0 %v1034
    %1121 = vmatpush.msra.mxu0 %v1033
    %1122 = vmatpush.msra.mxu0 %v1032
    %1123 = vmatpush.msra.mxu0 %v1031
    %1124 = vmatpush.msra.mxu0 %v1030
    %1125 = vmatpush.msra.mxu0 %v1029
    %1126 = vmatpush.msra.mxu0 %v1028
    %1127 = vmatpush.msra.mxu0 %v1027
    %1128 = vmatpush.msra.mxu0 %v1026
    %1129 = vmatpush.msra.mxu0 %v1025
    %1130 = vmatpush.msra.mxu0 %v1024
    %1131 = vmatmul.f32.gmra.mxu0 %v1049
    %v1132 = vpop.f32.mrf.mxu0
    %v1133 = vadd.f32 %v395, %v1132
    %1134 = vmatmul.f32.gmra.mxu0 %v1051
    %v1135 = vpop.f32.mrf.mxu0
    %v1136 = vadd.f32 %v400, %v1135
    %1137 = vmatmul.f32.gmra.mxu0 %v1053
    %v1138 = vpop.f32.mrf.mxu0
    %v1139 = vadd.f32 %v405, %v1138
    %1140 = vmatmul.f32.gmra.mxu0 %v1055
    %v1141 = vpop.f32.mrf.mxu0
    %v1142 = vadd.f32 %v410, %v1141
    %1143 = vmatmul.f32.gmra.mxu0 %v1057
    %v1144 = vpop.f32.mrf.mxu0
    %v1145 = vadd.f32 %v415, %v1144
    %1146 = vmatmul.f32.gmra.mxu0 %v1059
    %v1147 = vpop.f32.mrf.mxu0
    %v1148 = vadd.f32 %v420, %v1147
    %1149 = vmatmul.f32.gmra.mxu0 %v1061
    %v1150 = vpop.f32.mrf.mxu0
    %v1151 = vadd.f32 %v425, %v1150
    %1152 = vmatmul.f32.gmra.mxu0 %v1063
    %v1153 = vpop.f32.mrf.mxu0
    %v1154 = vadd.f32 %v430, %v1153
    %1155 = vmatmul.f32.gmra.mxu0 %v1065
    %v1156 = vpop.f32.mrf.mxu0
    %v1157 = vadd.f32 %v435, %v1156
    %1158 = vmatmul.f32.gmra.mxu0 %v1067
    %v1159 = vpop.f32.mrf.mxu0
    %v1160 = vadd.f32 %v440, %v1159
    %1161 = vmatmul.f32.gmra.mxu0 %v1069
    %v1162 = vpop.f32.mrf.mxu0
    %v1163 = vadd.f32 %v445, %v1162
    %1164 = vmatmul.f32.gmra.mxu0 %v1071
    %v1165 = vpop.f32.mrf.mxu0
    %v1166 = vadd.f32 %v450, %v1165
    %1167 = vmatmul.f32.gmra.mxu0 %v1073
    %v1168 = vpop.f32.mrf.mxu0
    %v1169 = vadd.f32 %v455, %v1168
    %1170 = vdwg.mxu0
    %1171 = vmatpush.msra.mxu0 0.0
    %1172 = vmatpush.msra.mxu0 0.0
    %1173 = vmatpush.msra.mxu0 0.0
    %1174 = vmatpush.msra.mxu0 0.0
    %1175 = vmatpush.msra.mxu0 0.0
    %1176 = vmatpush.msra.mxu0 0.0
    %1177 = vmatpush.msra.mxu0 0.0
    %1178 = vmatpush.msra.mxu0 %v1048
    %1179 = vmatpush.msra.mxu0 %v1047
    %1180 = vmatpush.msra.mxu0 %v1046
    %1181 = vmatpush.msra.mxu0 %v1045
    %1182 = vmatpush.msra.mxu0 %v1044
    %1183 = vmatpush.msra.mxu0 %v1043
    %1184 = vmatpush.msra.mxu0 %v1042
    %1185 = vmatpush.msra.mxu0 %v1041
    %1186 = vmatpush.msra.mxu0 %v1040
    %1187 = vmatmul.f32.gmra.mxu0 %v1077
    %v1188 = vpop.f32.mrf.mxu0
    %v1189 = vadd.f32 %v1133, %v1188
    %1190 = vmatmul.f32.gmra.mxu0 %v1080
    %v1191 = vpop.f32.mrf.mxu0
    %v1192 = vadd.f32 %v1136, %v1191
    %1193 = vmatmul.f32.gmra.mxu0 %v1083
    %v1194 = vpop.f32.mrf.mxu0
    %v1195 = vadd.f32 %v1139, %v1194
    %1196 = vmatmul.f32.gmra.mxu0 %v1086
    %v1197 = vpop.f32.mrf.mxu0
    %v1198 = vadd.f32 %v1142, %v1197
    %1199 = vmatmul.f32.gmra.mxu0 %v1089
    %v1200 = vpop.f32.mrf.mxu0
    %v1201 = vadd.f32 %v1145, %v1200
    %1202 = vmatmul.f32.gmra.mxu0 %v1092
    %v1203 = vpop.f32.mrf.mxu0
    %v1204 = vadd.f32 %v1148, %v1203
    %1205 = vmatmul.f32.gmra.mxu0 %v1095
    %v1206 = vpop.f32.mrf.mxu0
    %v1207 = vadd.f32 %v1151, %v1206
    %1208 = vmatmul.f32.gmra.mxu0 %v1098
    %v1209 = vpop.f32.mrf.mxu0
    %v1210 = vadd.f32 %v1154, %v1209
    %1211 = vmatmul.f32.gmra.mxu0 %v1101
    %v1212 = vpop.f32.mrf.mxu0
    %v1213 = vadd.f32 %v1157, %v1212
    %1214 = vmatmul.f32.gmra.mxu0 %v1104
    %v1215 = vpop.f32.mrf.mxu0
    %v1216 = vadd.f32 %v1160, %v1215
    %1217 = vmatmul.f32.gmra.mxu0 %v1107
    %v1218 = vpop.f32.mrf.mxu0
    %v1219 = vadd.f32 %v1163, %v1218
    %1220 = vmatmul.f32.gmra.mxu0 %v1110
    %v1221 = vpop.f32.mrf.mxu0
    %v1222 = vadd.f32 %v1166, %v1221
    %1223 = vmatmul.f32.gmra.mxu0 %v1113
    %v1224 = vpop.f32.mrf.mxu0
    %v1225 = vadd.f32 %v1169, %v1224
    %1226 = vdwg.mxu0
    %v1227 = vadd.f32 %v1189, %v1192
    %v1228 = vadd.f32 %v1227, %v1195
    %v1229 = vadd.f32 %v1228, %v1198
    %v1230 = vadd.f32 %v1229, %v1201
    %v1231 = vadd.f32 %v1230, %v1204
    %v1232 = vadd.f32 %v1231, %v1207
    %v1233 = vadd.f32 %v1232, %v1210
    %v1234 = vadd.f32 %v1233, %v1213
    %v1235 = vadd.f32 %v1234, %v1216
    %v1236 = vadd.f32 %v1235, %v1219
    %v1237 = vadd.f32 %v1236, %v1222
    %vm1238 = vcmask 1043456
    %v1239 = vsel %vm1238, %v1225, 0.0
    %v1240 = vadd.f32 %v1237, %v1239
    %v1241 = vrot.slane %v1240, 4
    %v1242 = vadd.f32 %v1240, %v1241
    %v1243 = vrot.slane %v1242, 2
    %v1244 = vadd.f32 %v1242, %v1243
    %v1245 = vrot.slane %v1244, 1
    %v1246 = vadd.f32 %v1244, %v1245
    %v1247 = vrcp.pop 100.0
    %v1248 = vmul.f32 100.0, %v1247
    %v1249 = vsub.f32 1.0, %v1248
    %v1250 = vmul.f32 %v1247, %v1249
    %v1251 = vadd.f32 %v1247, %v1250
    %vm1252 = vweird.f32 %v1247
    %v1253 = vsel %vm1252, %v1247, %v1251
    %v1254 = vmul.f32 %v1246, %v1253
    %v1255 = vsub.f32 %v1189, %v1254
    %v1256 = vsub.f32 %v1192, %v1254
    %v1257 = vsub.f32 %v1195, %v1254
    %v1258 = vsub.f32 %v1198, %v1254
    %v1259 = vsub.f32 %v1201, %v1254
    %v1260 = vsub.f32 %v1204, %v1254
    %v1261 = vsub.f32 %v1207, %v1254
    %v1262 = vsub.f32 %v1210, %v1254
    %v1263 = vsub.f32 %v1213, %v1254
    %v1264 = vsub.f32 %v1216, %v1254
    %v1265 = vsub.f32 %v1219, %v1254
    %v1266 = vsub.f32 %v1222, %v1254
    %v1267 = vsub.f32 %v1225, %v1254
    %v1268 = vmul.f32 %v1255, %v1255
    %v1269 = vmul.f32 %v1256, %v1256
    %v1270 = vmul.f32 %v1257, %v1257
    %v1271 = vmul.f32 %v1258, %v1258
    %v1272 = vmul.f32 %v1259, %v1259
    %v1273 = vmul.f32 %v1260, %v1260
    %v1274 = vmul.f32 %v1261, %v1261
    %v1275 = vmul.f32 %v1262, %v1262
    %v1276 = vmul.f32 %v1263, %v1263
    %v1277 = vmul.f32 %v1264, %v1264
    %v1278 = vmul.f32 %v1265, %v1265
    %v1279 = vmul.f32 %v1266, %v1266
    %v1280 = vmul.f32 %v1267, %v1267
    %v1281 = vadd.f32 %v1268, %v1269
    %v1282 = vadd.f32 %v1281, %v1270
    %v1283 = vadd.f32 %v1282, %v1271
    %v1284 = vadd.f32 %v1283, %v1272
    %v1285 = vadd.f32 %v1284, %v1273
    %v1286 = vadd.f32 %v1285, %v1274
    %v1287 = vadd.f32 %v1286, %v1275
    %v1288 = vadd.f32 %v1287, %v1276
    %v1289 = vadd.f32 %v1288, %v1277
    %v1290 = vadd.f32 %v1289, %v1278
    %v1291 = vadd.f32 %v1290, %v1279
    %v1292 = vsel %vm1238, %v1280, 0.0
    %v1293 = vadd.f32 %v1291, %v1292
    %v1294 = vrot.slane %v1293, 4
    %v1295 = vadd.f32 %v1293, %v1294
    %v1296 = vrot.slane %v1295, 2
    %v1297 = vadd.f32 %v1295, %v1296
    %v1298 = vrot.slane %v1297, 1
    %v1299 = vadd.f32 %v1297, %v1298
    %v1300 = vmul.f32 %v1299, %v1253
    %v1301 = vadd.f32 %v1300, 1e-05
    %v1302 = vrsqrt.pop %v1301
    %v1303 = vmul.f32 %v1302, %v1301
    %v1304 = vmul.f32 %v1303, %v1302
    %v1305 = vmul.f32 0.5, %v1304
    %v1306 = vsub.f32 1.5, %v1305
    %v1307 = vmul.f32 %v1302, %v1306
    %vm1308 = vweird.f32 %v1301
    %vm1309 = vweird.f32 %v1302
    %vm1310 = vmor %vm1308, %vm1309
    %v1311 = vsel %vm1310, %v1302, %v1307
    %v1312 = vmul.f32 %v1255, %v1311
    %v1313 = vmul.f32 %v1256, %v1311
    %v1314 = vmul.f32 %v1257, %v1311
    %v1315 = vmul.f32 %v1258, %v1311
    %v1316 = vmul.f32 %v1259, %v1311
    %v1317 = vmul.f32 %v1260, %v1311
    %v1318 = vmul.f32 %v1261, %v1311
    %v1319 = vmul.f32 %v1262, %v1311
    %v1320 = vmul.f32 %v1263, %v1311
    %v1321 = vmul.f32 %v1264, %v1311
    %v1322 = vmul.f32 %v1265, %v1311
    %v1323 = vmul.f32 %v1266, %v1311
    %v1324 = vmul.f32 %v1267, %v1311
    %v1325 = vmul.f32 %v1312, %v459
    %v1326 = vmul.f32 %v1313, %v463
    %v1327 = vmul.f32 %v1314, %v467
    %v1328 = vmul.f32 %v1315, %v471
    %v1329 = vmul.f32 %v1316, %v475
    %v1330 = vmul.f32 %v1317, %v479
    %v1331 = vmul.f32 %v1318, %v483
    %v1332 = vmul.f32 %v1319, %v487
    %v1333 = vmul.f32 %v1320, %v491
    %v1334 = vmul.f32 %v1321, %v495
    %v1335 = vmul.f32 %v1322, %v499
    %v1336 = vmul.f32 %v1323, %v503
    %v1337 = vmul.f32 %v1324, %v507
    %v1338 = vadd.f32 %v1325, %v511
    %v1339 = vadd.f32 %v1326, %v515
    %v1340 = vadd.f32 %v1327, %v519
    %v1341 = vadd.f32 %v1328, %v523
    %v1342 = vadd.f32 %v1329, %v527
    %v1343 = vadd.f32 %v1330, %v531
    %v1344 = vadd.f32 %v1331, %v535
    %v1345 = vadd.f32 %v1332, %v539
    %v1346 = vadd.f32 %v1333, %v543
    %v1347 = vadd.f32 %v1334, %v547
    %v1348 = vadd.f32 %v1335, %v551
    %v1349 = vadd.f32 %v1336, %v555
    %v1350 = vadd.f32 %v1337, %v559
    %v1351 = vmax.f32 %v1338, 0.0
    %v1352 = vmax.f32 %v1339, 0.0
    %v1353 = vmax.f32 %v1340, 0.0
    %v1354 = vmax.f32 %v1341, 0.0
    %v1355 = vmax.f32 %v1342, 0.0
    %v1356 = vmax.f32 %v1343, 0.0
    %v1357 = vmax.f32 %v1344, 0.0
    %v1358 = vmax.f32 %v1345, 0.0
    %v1359 = vmax.f32 %v1346, 0.0
    %v1360 = vmax.f32 %v1347, 0.0
    %v1361 = vmax.f32 %v1348, 0.0
    %v1362 = vmax.f32 %v1349, 0.0
    %v1363 = vmax.f32 %v1350, 0.0
    %v1364 = vld [vmem:[%s5] sm:$0x1]
    %1366 = vset.pattern.permute.xlu0 0
    %1367 = vperm.xlu0 %1366, %v561
    %v1368 = vpop.permute.xlu0 %1367
    %v1370 = vperm.slane %v1368, 0
    %vm1371 = vcmask 818176
    %v1373 = vsel %vm1371, %v1364, 0
    %v1376 = vsel %vm1238, %v1363, 0
    %1378 = vmatpush.msra.mxu0 0.0
    %1379 = vmatpush.msra.mxu0 0.0
    %1380 = vmatpush.msra.mxu0 0.0
    %1381 = vmatpush.msra.mxu0 %v1376
    %1382 = vmatpush.msra.mxu0 %v1362
    %1383 = vmatpush.msra.mxu0 %v1361
    %1384 = vmatpush.msra.mxu0 %v1360
    %1385 = vmatpush.msra.mxu0 %v1359
    %1386 = vmatpush.msra.mxu0 %v1358
    %1387 = vmatpush.msra.mxu0 %v1357
    %1388 = vmatpush.msra.mxu0 %v1356
    %1389 = vmatpush.msra.mxu0 %v1355
    %1390 = vmatpush.msra.mxu0 %v1354
    %1391 = vmatpush.msra.mxu0 %v1353
    %1392 = vmatpush.msra.mxu0 %v1352
    %1393 = vmatpush.msra.mxu0 %v1351
    %1394 = vmatmul.f32.gmra.mxu0 %v1373
    %v1395 = vpop.f32.mrf.mxu0
    %v1396 = vadd.f32 %v1370, %v1395
    %1397 = vdwg.mxu0
    %1398 = vst [vmem:[#allocation3] sm:$0x1] %v1396
    // Predicated region
    $region30: #{_discriminator_forward.1} parent=1 // pred_check
      _
    $region31: #{_discriminator_forward.1} parent=1 // pred_check_branch
      %1400 = sbr.rel (0) target = $region33
    $region32: #{_discriminator_forward.1} parent=1 // pred_region
      %1402 = vsyncadd [#allocation4], 0
      %s1404 = sshll.u32 [#allocation3], 4
      %s1405 = int_to_ptr.vmem [resolvable:$true] %s1404
      %s1406 = sshll.u32 %s7, 4
      %s1407 = int_to_ptr.hbm [resolvable:$true] %s1406
      %1409 = dma.vmem_to_hbm [thread:$0]  %s1405, 16, %s1407, [#allocation4]
    $region33: #{_discriminator_forward.1} parent=1 // pred_fallthru
      _
    // Predicated region
    $region34: #{_discriminator_forward.1} parent=1 // pred_check
      _
    $region35: #{_discriminator_forward.1} parent=1 // pred_check_branch
      %1411 = sbr.rel (0) target = $region37
    $region36: #{_discriminator_forward.1} parent=1 // pred_region
      %1413 = dma.done [#allocation4], 16
    $region37: #{_discriminator_forward.1} parent=1 // pred_fallthru
      _
    %1414 = vsyncpa [#allocation4], 1

</llo_original>
